<compile_context>
chip_gen: v7x
topology: tpu7x:2x2x1
jax: 0.10.0
libtpu: 0.0.40
codegen_flags: <defaults>
</compile_context>

<pallas_src>
import functools

import jax
import jax.numpy as jnp
from jax import lax
from jax.experimental import pallas as pl
from jax.experimental.pallas import tpu as pltpu


def _cdiv(a, b):
    return (a + b - 1) // b


def _round_up(x, m):
    return ((x + m - 1) // m) * m


def _hybrid_loss_kernel(logits_ref, targets_ref, out_ref, acc_ref, *,
                        alpha, gamma, smoothing, focal_weight,
                        true_b, tile_b, tiles_per_split):
    c = pl.program_id(0)            # split index ("parallel" axis)
    i = pl.program_id(1)            # batch tile within the split ("arbitrary")
    num_i = pl.num_programs(1)

    # Zero the per-row accumulator at the start of each split's reduction.
    @pl.when(i == 0)
    def _():
        acc_ref[...] = jnp.zeros_like(acc_ref)

    row_offset = (c * tiles_per_split + i) * tile_b

    # Fully-padded tiles (trailing tiles of the last split, whose block index
    # was clamped in the index_map) skip all compute.
    @pl.when(row_offset < true_b)
    def _():
        logits = logits_ref[...].astype(jnp.float32)          # (TB, C)
        tgt = targets_ref[...]                                 # (TB, 1) int32
        tb, n_classes = logits.shape

        # --- shared log-sum-exp (only (TB, C)-wide transcendental work) ---
        m = jnp.max(logits, axis=-1, keepdims=True)            # (TB, 1)
        sumexp = jnp.sum(jnp.exp(logits - m), axis=-1, keepdims=True)
        lse = m + jnp.log(sumexp)                               # (TB, 1)

        # Gather the target logit with compare + select (no dense one-hot math).
        classes = lax.broadcasted_iota(jnp.int32, (tb, n_classes), 1)
        target_logit = jnp.sum(jnp.where(classes == tgt, logits, 0.0),
                               axis=-1, keepdims=True)          # (TB, 1)
        row_logit_sum = jnp.sum(logits, axis=-1, keepdims=True)  # (TB, 1)

        # --- Focal loss term (per row) ---
        ce = lse - target_logit                                 # = -log p(target)
        pt = jnp.exp(-ce)
        one_minus_pt = 1.0 - pt
        if float(gamma) == 2.0:                                 # default fast path
            mod = one_minus_pt * one_minus_pt
        elif float(gamma) == 1.0:
            mod = one_minus_pt
        elif float(gamma) == 0.0:
            mod = jnp.ones_like(one_minus_pt)
        else:
            mod = one_minus_pt ** gamma
        focal = alpha * mod * ce                                 # (TB, 1)

        # --- Label-smoothing CE, algebraically simplified ---
        #   sum_j -[(1-s)*onehot_j + s/C] * (logits_j - lse)
        # = (1-s)*ce + s*lse - (s/C)*sum_j logits_j
        ls = ((1.0 - smoothing) * ce + smoothing * lse
              - (smoothing / n_classes) * row_logit_sum)          # (TB, 1)

        combined = focal_weight * focal + (1.0 - focal_weight) * ls

        # Mask rows past the true batch (ragged last tile reads stale VMEM,
        # which is harmless once masked here).
        row_ids = lax.broadcasted_iota(jnp.int32, (tb, 1), 0) + row_offset
        acc_ref[...] += jnp.where(row_ids < true_b, combined, 0.0)

    # Epilogue: this split's partial of the final mean, written exactly once
    # into its lane-dense (1, 128) output block.
    @pl.when(i == num_i - 1)
    def _():
        partial = jnp.sum(acc_ref[...]) * (1.0 / true_b)
        out_ref[...] = jnp.full(out_ref.shape, partial, dtype=jnp.float32)


def hybrid_loss(logits, targets, *, focal_alpha=1.0, focal_gamma=2.0,
                label_smoothing=0.1, focal_weight=0.5,
                block_b=2048, num_splits=2,
                tile_budget_bytes=4 * 1024 * 1024):
    """logits: (B, C) float (f32 or bf16); targets: (B,) int class indices.

    Returns a scalar f32 loss matching the PyTorch HybridLoss forward.
    """
    B, C = logits.shape
    itemsize = jnp.dtype(logits.dtype).itemsize

    # Batch tile: multiple of 8 sublanes; the double-buffered logits tile must
    # fit a conservative VMEM budget (leaves room for f32 temporaries on v7x's
    # 64 MiB VMEM).
    tb_budget = max(8, (tile_budget_bytes // max(1, 2 * C * itemsize)) // 8 * 8)
    tb = min(block_b, tb_budget, _round_up(_cdiv(B, num_splits), 8))
    tb = max(8, tb)

    total_tiles = _cdiv(B, tb)
    num_splits = max(1, min(num_splits, total_tiles))
    tiles_per_split = _cdiv(total_tiles, num_splits)
    max_block = total_tiles - 1

    targets_in = targets.astype(jnp.int32).reshape(B, 1)

    kernel = functools.partial(
        _hybrid_loss_kernel,
        alpha=float(focal_alpha),
        gamma=float(focal_gamma),
        smoothing=float(label_smoothing),
        focal_weight=float(focal_weight),
        true_b=B,
        tile_b=tb,
        tiles_per_split=tiles_per_split,
    )

    # Clamp beyond-range block indices (last split's trailing tiles) onto the
    # last valid block; the kernel skips compute for them via pl.when.
    def _block_index(c, i):
        return jnp.minimum(c * tiles_per_split + i, max_block)

    # Explicit VMEM limit: double-buffered inputs + f32 temporaries headroom
    # + scratch + output (well below physical VMEM on all generations).
    in_bytes = 2 * tb * C * itemsize + 2 * tb * 128 * 4
    work_bytes = 6 * tb * C * 4
    vmem_limit = int(min(48 * 1024 * 1024,
                         max(24 * 1024 * 1024,
                             in_bytes + work_bytes + (1 << 16))))

    cost = pl.CostEstimate(
        flops=10 * B * C,
        transcendentals=B * C + 3 * B,
        bytes_accessed=B * C * itemsize + B * 4 + num_splits * 128 * 4,
    )

    out = pl.pallas_call(
        kernel,
        out_shape=jax.ShapeDtypeStruct((1, num_splits * 128), jnp.float32),
        grid=(num_splits, tiles_per_split),
        in_specs=[
            pl.BlockSpec((tb, C), lambda c, i: (_block_index(c, i), 0)),
            pl.BlockSpec((tb, 1), lambda c, i: (_block_index(c, i), 0)),
        ],
        out_specs=pl.BlockSpec((1, 128), lambda c, i: (0, c)),
        scratch_shapes=[pltpu.VMEM((tb, 1), jnp.float32)],
        compiler_params=pltpu.CompilerParams(
            dimension_semantics=("parallel", "arbitrary"),
            vmem_limit_bytes=vmem_limit),
        cost_estimate=cost,
    )(logits, targets_in)

    partials = out.reshape(num_splits, 128)[:, 0]
    return jnp.sum(partials)


def _reference_hybrid_loss(logits, targets, *, focal_alpha=1.0, focal_gamma=2.0,
                           label_smoothing=0.1, focal_weight=0.5):
    """Pure-JAX reference mirroring the PyTorch module."""
    logits = logits.astype(jnp.float32)
    B, C = logits.shape
    log_probs = jax.nn.log_softmax(logits, axis=-1)
    onehot = jax.nn.one_hot(targets, C, dtype=jnp.float32)
    ce = -jnp.sum(onehot * log_probs, axis=-1)
    pt = jnp.exp(-ce)
    focal = jnp.mean(focal_alpha * (1.0 - pt) ** focal_gamma * ce)
    smooth = (1.0 - label_smoothing) * onehot + label_smoothing / C
    ls = jnp.mean(jnp.sum(-smooth * log_probs, axis=-1))
    return focal_weight * focal + (1.0 - focal_weight) * ls


if __name__ == "__main__":
    key = jax.random.PRNGKey(0)
    k1, k2, k3, k4, k5, k6 = jax.random.split(key, 6)

    # Case 1: small batch, tile-aligned, f32 logits.
    B, C = 8, 16
    logits = jax.random.normal(k1, (B, C), dtype=jnp.float32)
    targets = jax.random.randint(k2, (B,), 0, C, dtype=jnp.int32)
    loss = jax.block_until_ready(hybrid_loss(logits, targets))
    ref = jax.block_until_ready(_reference_hybrid_loss(logits, targets))
    assert jnp.allclose(loss, ref, rtol=1e-5, atol=1e-5), (loss, ref)

    # Case 2: ragged batch (exercises partial-tile masking), non-128 C.
    B2, C2 = 13, 30
    logits2 = jax.random.normal(k3, (B2, C2), dtype=jnp.float32)
    targets2 = jax.random.randint(k4, (B2,), 0, C2, dtype=jnp.int32)
    loss2 = jax.block_until_ready(hybrid_loss(logits2, targets2))
    ref2 = jax.block_until_ready(_reference_hybrid_loss(logits2, targets2))
    assert jnp.allclose(loss2, ref2, rtol=1e-5, atol=1e-5), (loss2, ref2)

    # Case 3: bfloat16 logits (half the HBM traffic; kernel upcasts per tile).
    logits_bf16 = logits.astype(jnp.bfloat16)
    loss3 = jax.block_until_ready(hybrid_loss(logits_bf16, targets))
    ref3 = jax.block_until_ready(
        _reference_hybrid_loss(logits_bf16.astype(jnp.float32), targets))
    assert jnp.allclose(loss3, ref3, rtol=1e-4, atol=1e-4), (loss3, ref3)

    # Case 4: multi-tile reduction per split + clamped/skipped trailing tile.
    B4, C4 = 300, 7
    logits4 = jax.random.normal(k5, (B4, C4), dtype=jnp.float32)
    targets4 = jax.random.randint(k6, (B4,), 0, C4, dtype=jnp.int32)
    loss4 = jax.block_until_ready(hybrid_loss(logits4, targets4, block_b=64))
    ref4 = jax.block_until_ready(_reference_hybrid_loss(logits4, targets4))
    assert jnp.allclose(loss4, ref4, rtol=1e-5, atol=1e-5), (loss4, ref4)

    print("KERNEL_OK")
</pallas_src>

<mosaic_0001>
module attributes {stable_mosaic.version = 11 : i64} {
  func.func @_hybrid_loss_kernel(%arg0: i32, %arg1: i32, %arg2: memref<8x16xf32, #tpu.memory_space<vmem>>, %arg3: memref<8x1xi32, #tpu.memory_space<vmem>>, %arg4: memref<1x128xf32, #tpu.memory_space<vmem>>, %arg5: memref<8x1xf32, #tpu.memory_space<vmem>>) attributes {dimension_semantics = [#tpu.dimension_semantics<parallel>, #tpu.dimension_semantics<arbitrary>], iteration_bounds = array<i64: 1, 1>, scalar_prefetch = 0 : i64, scratch_operands = 1 : i64, tpu.core_type = #tpu.core_type<tc>, window_params = [{transform_indices = @transform_0, window_bounds = array<i64: 8, 16>}, {transform_indices = @transform_1, window_bounds = array<i64: 8, 1>}, {transform_indices = @transform_2, window_bounds = array<i64: 1, 128>}]} {
    %c0_i32 = arith.constant 0 : i32
    %0 = arith.cmpi eq, %arg1, %c0_i32 : i32
    %1 = arith.extui %0 : i1 to i32
    %c0_i32_0 = arith.constant 0 : i32
    %2 = arith.cmpi ne, %1, %c0_i32_0 : i32
    scf.if %2 {
      %cst = arith.constant 0.000000e+00 : f32
      %12 = vector.broadcast %cst : f32 to vector<8x1xf32>
      %c0 = arith.constant 0 : index
      %c0_5 = arith.constant 0 : index
      %13 = vector.load %arg5[%c0, %c0_5] : memref<8x1xf32, #tpu.memory_space<vmem>>, vector<8x1xf32>
      tpu.vector_store %arg5[%c0, %c0_5], %12 {strides = array<i32>} : memref<8x1xf32, #tpu.memory_space<vmem>>, vector<8x1xf32>,
    } else {
    }
    %c1_i32 = arith.constant 1 : i32
    %3 = arith.muli %arg0, %c1_i32 : i32
    %4 = arith.addi %3, %arg1 : i32
    %c8_i32 = arith.constant 8 : i32
    %5 = arith.muli %4, %c8_i32 : i32
    %c8_i32_1 = arith.constant 8 : i32
    %6 = arith.cmpi slt, %5, %c8_i32_1 : i32
    %7 = arith.extui %6 : i1 to i32
    %c0_i32_2 = arith.constant 0 : i32
    %8 = arith.cmpi ne, %7, %c0_i32_2 : i32
    scf.if %8 {
      %c0 = arith.constant 0 : index
      %c0_5 = arith.constant 0 : index
      %12 = vector.load %arg2[%c0, %c0_5] : memref<8x16xf32, #tpu.memory_space<vmem>>, vector<8x16xf32>
      %c0_6 = arith.constant 0 : index
      %c0_7 = arith.constant 0 : index
      %13 = vector.load %arg3[%c0_6, %c0_7] : memref<8x1xi32, #tpu.memory_space<vmem>>, vector<8x1xi32>
      %cst = arith.constant dense<0xFF800000> : vector<8xf32>
      %14 = vector.multi_reduction <maximumf>, %12, %cst [1] : vector<8x16xf32> to vector<8xf32>
      %15 = vector.shape_cast %14 : vector<8xf32> to vector<8x1xf32>
      %16 = vector.broadcast %15 : vector<8x1xf32> to vector<8x16xf32>
      %17 = arith.subf %12, %16 : vector<8x16xf32>
      %18 = math.exp %17 : vector<8x16xf32>
      %cst_8 = arith.constant dense<0.000000e+00> : vector<8xf32>
      %19 = vector.multi_reduction <add>, %18, %cst_8 [1] : vector<8x16xf32> to vector<8xf32>
      %20 = vector.shape_cast %19 : vector<8xf32> to vector<8x1xf32>
      %21 = math.log %20 : vector<8x1xf32>
      %22 = arith.addf %15, %21 : vector<8x1xf32>
      %23 = tpu.iota {dimensions = array<i32: 1>} : vector<8x16xi32>
      %24 = vector.broadcast %13 : vector<8x1xi32> to vector<8x16xi32>
      %25 = arith.cmpi eq, %23, %24 : vector<8x16xi32>
      %cst_9 = arith.constant 0.000000e+00 : f32
      %26 = vector.broadcast %cst_9 : f32 to vector<8x16xf32>
      %27 = arith.select %25, %12, %26 : vector<8x16xi1>, vector<8x16xf32>
      %cst_10 = arith.constant dense<0.000000e+00> : vector<8xf32>
      %28 = vector.multi_reduction <add>, %27, %cst_10 [1] : vector<8x16xf32> to vector<8xf32>
      %29 = vector.shape_cast %28 : vector<8xf32> to vector<8x1xf32>
      %cst_11 = arith.constant dense<0.000000e+00> : vector<8xf32>
      %30 = vector.multi_reduction <add>, %12, %cst_11 [1] : vector<8x16xf32> to vector<8xf32>
      %31 = vector.shape_cast %30 : vector<8xf32> to vector<8x1xf32>
      %32 = arith.subf %22, %29 : vector<8x1xf32>
      %cst_12 = arith.constant 0.000000e+00 : f32
      %33 = vector.broadcast %cst_12 : f32 to vector<8x1xf32>
      %34 = arith.subf %33, %32 : vector<8x1xf32>
      %35 = math.exp %34 : vector<8x1xf32>
      %cst_13 = arith.constant 1.000000e+00 : f32
      %36 = vector.broadcast %cst_13 : f32 to vector<8x1xf32>
      %37 = arith.subf %36, %35 : vector<8x1xf32>
      %38 = arith.mulf %37, %37 : vector<8x1xf32>
      %cst_14 = arith.constant 1.000000e+00 : f32
      %39 = vector.broadcast %cst_14 : f32 to vector<8x1xf32>
      %40 = arith.mulf %39, %38 : vector<8x1xf32>
      %41 = arith.mulf %40, %32 : vector<8x1xf32>
      %cst_15 = arith.constant 0.899999976 : f32
      %42 = vector.broadcast %cst_15 : f32 to vector<8x1xf32>
      %43 = arith.mulf %42, %32 : vector<8x1xf32>
      %cst_16 = arith.constant 1.000000e-01 : f32
      %44 = vector.broadcast %cst_16 : f32 to vector<8x1xf32>
      %45 = arith.mulf %44, %22 : vector<8x1xf32>
      %46 = arith.addf %43, %45 : vector<8x1xf32>
      %cst_17 = arith.constant 6.250000e-03 : f32
      %47 = vector.broadcast %cst_17 : f32 to vector<8x1xf32>
      %48 = arith.mulf %47, %31 : vector<8x1xf32>
      %49 = arith.subf %46, %48 : vector<8x1xf32>
      %cst_18 = arith.constant 5.000000e-01 : f32
      %50 = vector.broadcast %cst_18 : f32 to vector<8x1xf32>
      %51 = arith.mulf %50, %41 : vector<8x1xf32>
      %cst_19 = arith.constant 5.000000e-01 : f32
      %52 = vector.broadcast %cst_19 : f32 to vector<8x1xf32>
      %53 = arith.mulf %52, %49 : vector<8x1xf32>
      %54 = arith.addf %51, %53 : vector<8x1xf32>
      %55 = tpu.iota {dimensions = array<i32: 0>} : vector<8x1xi32>
      %56 = vector.broadcast %5 : i32 to vector<8x1xi32>
      %57 = arith.addi %55, %56 : vector<8x1xi32>
      %c0_20 = arith.constant 0 : index
      %c0_21 = arith.constant 0 : index
      %58 = vector.load %arg5[%c0_20, %c0_21] : memref<8x1xf32, #tpu.memory_space<vmem>>, vector<8x1xf32>
      %c8_i32_22 = arith.constant 8 : i32
      %59 = vector.broadcast %c8_i32_22 : i32 to vector<8x1xi32>
      %60 = arith.cmpi slt, %57, %59 : vector<8x1xi32>
      %cst_23 = arith.constant 0.000000e+00 : f32
      %61 = vector.broadcast %cst_23 : f32 to vector<8x1xf32>
      %62 = arith.select %60, %54, %61 : vector<8x1xi1>, vector<8x1xf32>
      %63 = arith.addf %58, %62 : vector<8x1xf32>
      %c0_24 = arith.constant 0 : index
      %c0_25 = arith.constant 0 : index
      %64 = vector.load %arg5[%c0_24, %c0_25] : memref<8x1xf32, #tpu.memory_space<vmem>>, vector<8x1xf32>
      tpu.vector_store %arg5[%c0_24, %c0_25], %63 {strides = array<i32>} : memref<8x1xf32, #tpu.memory_space<vmem>>, vector<8x1xf32>,
    } else {
    }
    %c0_i32_3 = arith.constant 0 : i32
    %9 = arith.cmpi eq, %arg1, %c0_i32_3 : i32
    %10 = arith.extui %9 : i1 to i32
    %c0_i32_4 = arith.constant 0 : i32
    %11 = arith.cmpi ne, %10, %c0_i32_4 : i32
    scf.if %11 {
      %c0 = arith.constant 0 : index
      %c0_5 = arith.constant 0 : index
      %12 = vector.load %arg5[%c0, %c0_5] : memref<8x1xf32, #tpu.memory_space<vmem>>, vector<8x1xf32>
      %13 = vector.shape_cast %12 : vector<8x1xf32> to vector<1x8x1xf32>
      %cst = arith.constant dense<0.000000e+00> : vector<1xf32>
      %14 = vector.multi_reduction <add>, %13, %cst [1, 2] : vector<1x8x1xf32> to vector<1xf32>
      %15 = vector.shape_cast %14 : vector<1xf32> to vector<1x1x1xf32>
      %16 = vector.extract %15[0, 0, 0] : f32 from vector<1x1x1xf32>
      %cst_6 = arith.constant 1.250000e-01 : f32
      %17 = arith.mulf %16, %cst_6 : f32
      %18 = vector.broadcast %17 : f32 to vector<1x128xf32>
      %c0_7 = arith.constant 0 : index
      %c0_8 = arith.constant 0 : index
      %19 = vector.load %arg4[%c0_7, %c0_8] : memref<1x128xf32, #tpu.memory_space<vmem>>, vector<1x128xf32>
      tpu.vector_store %arg4[%c0_7, %c0_8], %18 {strides = array<i32>} : memref<1x128xf32, #tpu.memory_space<vmem>>, vector<1x128xf32>,
    } else {
    }
    return
  }
  func.func @transform_0(%arg0: i32, %arg1: i32) -> (i32, i32) {
    %c1_i32 = arith.constant 1 : i32
    %0 = arith.muli %arg0, %c1_i32 : i32
    %1 = arith.addi %0, %arg1 : i32
    %c0_i32 = arith.constant 0 : i32
    %2 = arith.minsi %1, %c0_i32 : i32
    %c0_i32_0 = arith.constant 0 : i32
    %c0_i32_1 = arith.constant 0 : i32
    return %2, %c0_i32_0 : i32, i32
  }
  func.func @transform_1(%arg0: i32, %arg1: i32) -> (i32, i32) {
    %c1_i32 = arith.constant 1 : i32
    %0 = arith.muli %arg0, %c1_i32 : i32
    %1 = arith.addi %0, %arg1 : i32
    %c0_i32 = arith.constant 0 : i32
    %2 = arith.minsi %1, %c0_i32 : i32
    %c0_i32_0 = arith.constant 0 : i32
    %c0_i32_1 = arith.constant 0 : i32
    return %2, %c0_i32_0 : i32, i32
  }
  func.func @transform_2(%arg0: i32, %arg1: i32) -> (i32, i32) {
    %c0_i32 = arith.constant 0 : i32
    %c0_i32_0 = arith.constant 0 : i32
    return %c0_i32, %arg0 : i32, i32
  }
}

</mosaic_0001>

<llo_original>
// kernel: tpu_custom_call.1
$region0: #{tpu_custom_call.1}
  #allocation0 [shape = 'u32[]', space=smem, size = 0x4, offset = 0x4, fixed_abs, tag = 'smem constant byte address 0x4 - core index']
  #allocation1 [shape = 'u32[144,128]{1,0:T(1,128)}', space=vmem, size = 0x12000, scoped, tag = 'internal scratch']
  #allocation2 [shape = 'f32[8,1]{1,0:T(8,128)}', space=vmem, size = 0x1000, scoped, tag = 'scratch operand']
  %s0 = inlined_call_operand.vmem [shape: f32[8,16], index: 0, kind: input, shape index: {}]
  %s1 = inlined_call_operand.vmem [shape: s32[8,1], index: 1, kind: input, shape index: {}]
  %s2 = inlined_call_operand.hbm [shape: f32[1,128], index: 2, kind: output, shape index: {}]
  %s3 = sld [smem:[#allocation0]]
  $region30: #{tpu_custom_call.1} parent=0
    _
  %s5 = ssub.s32 1, %s3
  %s6 = scalar_select 0, %s5, %s3
  $region1: #{tpu_custom_call.1} parent=0
    #allocation3 [shape = 'u8[512]{0}', space=vmem, size = 0x400, scoped, tag = 'output window, operand 0, single buffered']
    #allocation4 [shape = 's32[1]{0}', space=sflag, size = 0x4, scoped, tag = 'scoped memory for tpu_custom_call.1']
    %7 = vsyncpa [#allocation4], 0
    // Predicated region
    $region2: #{tpu_custom_call.1} parent=1 // pred_check
      _
    $region3: #{tpu_custom_call.1} parent=1 // pred_check_branch
      %9 = sbr.rel (0) target = $region5
    $region4: #{tpu_custom_call.1} parent=1 // pred_region
      %s10 = sadd.s32 0, 0
      %p11 = scmp.lt.s32.totalorder %s10, 0
      %s12 = scalar_select %p11, %s10, 0
      %p13 = scmp.lt.s32.totalorder %s12, 0
      %s14 = scalar_select %p13, %s12, 0
      %s15 = smul.addr %s14, 8
      %s16 = scalar_lea.vmem %s0, %s15
      %s17 = sadd.s32 0, 0
      %p18 = scmp.lt.s32.totalorder %s17, 0
      %s19 = scalar_select %p18, %s17, 0
    $region5: #{tpu_custom_call.1} parent=1 // pred_fallthru
      _
    // Predicated region
    $region6: #{tpu_custom_call.1} parent=1 // pred_check
      _
    $region7: #{tpu_custom_call.1} parent=1 // pred_check_branch
      %21 = sbr.rel (0) target = $region9
    $region8: #{tpu_custom_call.1} parent=1 // pred_region
      %s22 = sadd.s32 0, 0
      %p23 = scmp.lt.s32.totalorder %s22, 0
      %s24 = scalar_select %p23, %s22, 0
      %p25 = scmp.lt.s32.totalorder %s24, 0
      %s26 = scalar_select %p25, %s24, 0
      %s27 = smul.addr %s26, 8
      %s28 = scalar_lea.vmem %s1, %s27
      %s29 = sadd.s32 0, 0
      %p30 = scmp.lt.s32.totalorder %s29, 0
      %s31 = scalar_select %p30, %s29, 0
    $region9: #{tpu_custom_call.1} parent=1 // pred_fallthru
      _
    %s32 = sadd.s32 0, 0
    %p33 = scmp.lt.s32.totalorder %s32, 0
    %s34 = scalar_select %p33, %s32, 0
    %p35 = scmp.lt.s32.totalorder %s34, 0
    %s36 = scalar_select %p35, %s34, 0
    %s37 = smul.addr %s36, 8
    %s38 = scalar_lea.vmem %s0, %s37
    %s39 = sadd.s32 0, 0
    %p40 = scmp.lt.s32.totalorder %s39, 0
    %s41 = scalar_select %p40, %s39, 0
    %p42 = scmp.lt.s32.totalorder %s41, 0
    %s43 = scalar_select %p42, %s41, 0
    %s44 = smul.addr %s43, 8
    %s45 = scalar_lea.vmem %s1, %s44
    %s46 = sadd.s32 0, 0
    %p47 = scmp.lt.s32.totalorder %s46, 0
    %s48 = scalar_select %p47, %s46, 0
    %p49 = scmp.lt.s32.totalorder %s48, 0
    %s50 = scalar_select %p49, %s48, 0
    %s51 = smul.addr %s50, 8
    %s52 = scalar_lea.vmem %s0, %s51
    %s53 = sadd.s32 0, 0
    %p54 = scmp.lt.s32.totalorder %s53, 0
    %s55 = scalar_select %p54, %s53, 0
    %s56 = sadd.s32 0, 0
    %p57 = scmp.lt.s32.totalorder %s56, 0
    %s58 = scalar_select %p57, %s56, 0
    %p59 = scmp.lt.s32.totalorder %s58, 0
    %s60 = scalar_select %p59, %s58, 0
    %s61 = smul.addr %s60, 8
    %s62 = scalar_lea.vmem %s1, %s61
    %s63 = sadd.s32 0, 0
    %p64 = scmp.lt.s32.totalorder %s63, 0
    %s65 = scalar_select %p64, %s63, 0
    %p66 = scmp.eq.s32.totalorder 0, 0
    // Predicated region
    $region10: #{tpu_custom_call.1} parent=1 // pred_check
      %p67 = pneg %p66
    $region11: #{tpu_custom_call.1} parent=1 // pred_check_branch
      %69 = sbr.rel (%p67) target = $region13
    $region12: #{tpu_custom_call.1} parent=1 // pred_region
      %vm70 = vcmask 7168
      %71 = vst.msk [vmem:[#allocation2] sm:$0xff] %vm70, 0.0
    $region13: #{tpu_custom_call.1} parent=1 // pred_fallthru
      _
    %s72 = sadd.s32 0, 0
    %s73 = smul.u32 %s72, 8
    %p74 = scmp.lt.s32.totalorder %s73, 8
    // Predicated region
    $region14: #{tpu_custom_call.1} parent=1 // pred_check
      %p75 = pneg %p74
    $region15: #{tpu_custom_call.1} parent=1 // pred_check_branch
      %77 = sbr.rel (%p75) target = $region17
    $region16: #{tpu_custom_call.1} parent=1 // pred_region
      %v78 = vld [vmem:[%s52] sm:$0xff]
      %v79 = vld [vmem:[%s62] sm:$0xff]
      %vm80 = vcmask 130048
      %v81 = vsel %vm80, %v78, -inf
      %82 = vmax.xlane.f32.xlu0 %v81
      %v83 = vpop.xlane.xlu0 %82
      %v84 = vsub.f32 %v78, %v83
      %v85 = vmul.f32 %v84, 1.442695
      %v86 = vpow.pop %v85
      %v87 = vsel %vm80, %v86, 0.0
      %88 = vadd.xlane.f32.xlu0 %v87
      %v89 = vpop.xlane.xlu0 %88
      %v90 = vlog2.pop %v89
      %v91 = vmul.f32 %v90, 0.6931472
      %v92 = vadd.f32 %v83, %v91
      %v93 = vlaneseq
      %v94 = vand.u32 %v93, 127
      %95 = vset.pattern.permute.xlu0 0
      %96 = vperm.xlu0 %95, %v79
      %v97 = vpop.permute.xlu0 %96
      %vm98 = vcmp.eq.s32.totalorder %v94, %v97
      %v99 = vsel %vm98, %v78, 0.0
      %v100 = vsel %vm80, %v99, 0.0
      %101 = vadd.xlane.f32.xlu0 %v100
      %v102 = vpop.xlane.xlu0 %101
      %v103 = vsel %vm80, %v78, 0.0
      %104 = vadd.xlane.f32.xlu0 %v103
      %v105 = vpop.xlane.xlu0 %104
      %v106 = vsub.f32 %v92, %v102
      %v107 = vsub.f32 0.0, %v106
      %v108 = vmul.f32 %v107, 1.442695
      %v109 = vpow.pop %v108
      %v110 = vsub.f32 1.0, %v109
      %v111 = vmul.f32 %v110, %v110
      %v112 = vmul.f32 %v111, %v106
      %v113 = vmul.f32 %v106, 0.9
      %v114 = vmul.f32 %v92, 0.1
      %v115 = vadd.f32 %v113, %v114
      %v116 = vmul.f32 %v105, 0.00625
      %v117 = vsub.f32 %v115, %v116
      %v118 = vmul.f32 %v112, 0.5
      %v119 = vmul.f32 %v117, 0.5
      %v120 = vadd.f32 %v118, %v119
      %v121 = vlaneseq
      %v122 = vshrl.u32 %v121, 7
      %v123 = vstv %s73
      %v124 = vadd.s32 %v122, %v123
      %v125 = vld [vmem:[#allocation2] sm:$0xff]
      %vm126 = vcmp.lt.s32.totalorder %v124, 8
      %v127 = vsel %vm126, %v120, 0.0
      %v128 = vadd.f32 %v125, %v127
      %vm129 = vcmask 7168
      %130 = vst.msk [vmem:[#allocation2] sm:$0xff] %vm129, %v128
    $region17: #{tpu_custom_call.1} parent=1 // pred_fallthru
      _
    // Predicated region
    $region18: #{tpu_custom_call.1} parent=1 // pred_check
      %p131 = pneg %p66
    $region19: #{tpu_custom_call.1} parent=1 // pred_check_branch
      %133 = sbr.rel (%p131) target = $region21
    $region20: #{tpu_custom_call.1} parent=1 // pred_region
      %v134 = vld [vmem:[#allocation2] sm:$0xff]
      %vm135 = vcmask 7168
      %v136 = vsel %vm135, %v134, 0.0
      %137 = vadd.xlane.f32.xlu0 %v136
      %v138 = vpop.xlane.xlu0 %137
      %v139 = vrot.slane %v138, 4
      %v140 = vadd.f32 %v138, %v139
      %v141 = vrot.slane %v140, 2
      %v142 = vadd.f32 %v140, %v141
      %v143 = vrot.slane %v142, 1
      %v144 = vadd.f32 %v142, %v143
      %s145 = vtos %v144
      %s146 = smul.f32 %s145, 0.125
      %v147 = vstv %s146
      %148 = vst [vmem:[#allocation3] sm:$0x1] %v147
    $region21: #{tpu_custom_call.1} parent=1 // pred_fallthru
      _
    // Predicated region
    $region22: #{tpu_custom_call.1} parent=1 // pred_check
      _
    $region23: #{tpu_custom_call.1} parent=1 // pred_check_branch
      %150 = sbr.rel (0) target = $region25
    $region24: #{tpu_custom_call.1} parent=1 // pred_region
      %s152 = ssub.s32 16, 16
      %153 = vsyncadd [#allocation4], %s152
      %s155 = sshll.u32 [#allocation3], 4
      %s156 = int_to_ptr.vmem [resolvable:$true] %s155
      %158 = dma.vmem_to_hbm [thread:$0]  %s156, 16, %s2, [#allocation4]
    $region25: #{tpu_custom_call.1} parent=1 // pred_fallthru
      _
    // Predicated region
    $region26: #{tpu_custom_call.1} parent=1 // pred_check
      _
    $region27: #{tpu_custom_call.1} parent=1 // pred_check_branch
      %160 = sbr.rel (0) target = $region29
    $region28: #{tpu_custom_call.1} parent=1 // pred_region
      %161 = dma.done [#allocation4], 16
    $region29: #{tpu_custom_call.1} parent=1 // pred_fallthru
      _
    %162 = vsyncpa [#allocation4], 1

</llo_original>
